<compile_context>
chip_gen: v6e
topology: v6e:2x2x1
jax: 0.10.0
libtpu: 0.0.40
codegen_flags: <defaults>
</compile_context>

<pallas_src>
import jax
import jax.numpy as jnp
from jax.experimental import pallas as pl
from jax.experimental.pallas import tpu as pltpu

_LANE = 128      # lane width (last-dim layout unit)
_SUBLANE = 8     # f32 sublane count


def _round_up(x: int, m: int) -> int:
    return ((x + m - 1) // m) * m


def _fused_forward_kernel(x_ref, u_ref, wt_ref, wb_ref, out_ref):
    """Per batch tile:  out = x_tile @ W_top + u_tile @ W_bot  (one wide slab)."""
    acc = jnp.dot(x_ref[...], wt_ref[...], preferred_element_type=jnp.float32)
    acc = acc + jnp.dot(u_ref[...], wb_ref[...], preferred_element_type=jnp.float32)
    out_ref[...] = acc.astype(out_ref.dtype)


def fold_weights(w_enc, a, b, w_dec, *, dtype=jnp.float32):
    """Batch-independent weight folding. Call once, reuse across forward calls.

    Returns (w_top, w_bot, (n_x, n_u, n_z)) where
      w_top : [n_x, N_pad] = [W_enc | W_enc@A | W_enc@W_dec] zero-padded to lane width
      w_bot : [n_u, N_pad] = [  0   |    B    |      0     ] zero-padded to lane width
    """
    f32 = jnp.float32
    w_enc = w_enc.astype(f32)
    a = a.astype(f32)
    b = b.astype(f32)
    w_dec = w_dec.astype(f32)

    n_x, n_z = w_enc.shape
    n_u = b.shape[0]
    n_out = 2 * n_z + n_x
    n_pad = _round_up(n_out, _LANE)   # lane-dense output slab

    w_top = jnp.concatenate([w_enc, w_enc @ a, w_enc @ w_dec], axis=1)   # [n_x, N]
    w_bot = jnp.concatenate(
        [jnp.zeros((n_u, n_z), f32), b, jnp.zeros((n_u, n_x), f32)], axis=1
    )                                                                    # [n_u, N]
    w_top = jnp.pad(w_top, ((0, 0), (0, n_pad - n_out))).astype(dtype)
    w_bot = jnp.pad(w_bot, ((0, 0), (0, n_pad - n_out))).astype(dtype)
    return w_top, w_bot, (int(n_x), int(n_u), int(n_z))


def _buf_bytes(rows: int, cols: int, nbuf: int, itemsize: int) -> int:
    """VMEM footprint of nbuf buffers of a [rows, cols] block (layout-padded)."""
    return nbuf * itemsize * _round_up(rows, _SUBLANE) * _round_up(cols, _LANE)


def model_forward_folded(x, u, w_top, w_bot, dims, *, tile_b=None,
                         compute_dtype=jnp.float32):
    """Fused ModelBase forward using pre-folded weights. Returns (x_hat, z, z_dot)."""
    n_x, n_u, n_z = dims
    n_out = 2 * n_z + n_x
    n_pad = w_top.shape[1]
    B = x.shape[0]

    x = x.astype(compute_dtype)
    u = u.astype(compute_dtype)
    act_isz = jnp.dtype(compute_dtype).itemsize
    w_isz = jnp.dtype(w_top.dtype).itemsize

    # ---- Batch tile heuristic ------------------------------------------------
    # >= ~8 grid steps for large B (>= 2 steps per TensorCore on v7x megacore),
    # multiple of 8, capped so double-buffered activations/output + the
    # single-buffered resident weights stay well inside scoped VMEM on v5e/v7x.
    if tile_b is None:
        per_row = (2 * act_isz * (_round_up(n_x, _LANE) + _round_up(n_u, _LANE))
                   + 2 * 4 * n_pad)
        budget = 20 * 1024 * 1024
        cap = max(_SUBLANE, min(2048, (budget // per_row) // _SUBLANE * _SUBLANE))
        tile_b = max(_SUBLANE, min(cap, _round_up(pl.cdiv(B, 8), _SUBLANE)))

    B_pad = _round_up(B, tile_b)
    if B_pad != B:
        x = jnp.pad(x, ((0, B_pad - B), (0, 0)))
        u = jnp.pad(u, ((0, B_pad - B), (0, 0)))

    grid = (B_pad // tile_b,)

    # ---- VMEM limit derived from actual buffer sizes (+2x headroom) ----------
    vmem_needed = (
        _buf_bytes(tile_b, n_x, 2, act_isz)       # x tile, double-buffered
        + _buf_bytes(tile_b, n_u, 2, act_isz)     # u tile, double-buffered
        + _buf_bytes(n_x, n_pad, 1, w_isz)        # W_top, Buffered(1) resident
        + _buf_bytes(n_u, n_pad, 1, w_isz)        # W_bot, Buffered(1) resident
        + _buf_bytes(tile_b, n_pad, 2, 4)         # f32 output slab, double-buffered
    )
    vmem_limit = int(min(64 * 1024 * 1024, max(4 * 1024 * 1024, 2 * vmem_needed)))

    # Advisory cost (unpadded work).
    flops = 2 * B * (n_x + n_u) * n_out
    bytes_accessed = int(act_isz * B * (n_x + n_u)
                         + w_isz * (n_x + n_u) * n_pad
                         + 4 * B * n_pad)

    # NOTE: if the model grows so the resident W_top exceeds a few MiB,
    # add an N grid axis to tile the weight (and on v5e a K-tiled reduction
    # axis with a VMEM f32 accumulator, marked "arbitrary").
    out = pl.pallas_call(
        _fused_forward_kernel,
        out_shape=jax.ShapeDtypeStruct((B_pad, n_pad), jnp.float32),
        grid_spec=pltpu.PrefetchScalarGridSpec(
            num_scalar_prefetch=0,
            grid=grid,
            in_specs=[
                pl.BlockSpec((tile_b, n_x), lambda i: (i, 0)),   # x tile
                pl.BlockSpec((tile_b, n_u), lambda i: (i, 0)),   # u tile
                pl.BlockSpec((n_x, n_pad), lambda i: (0, 0),
                             pipeline_mode=pl.Buffered(1)),      # W_top (resident)
                pl.BlockSpec((n_u, n_pad), lambda i: (0, 0),
                             pipeline_mode=pl.Buffered(1)),      # W_bot (resident)
            ],
            out_specs=pl.BlockSpec((tile_b, n_pad), lambda i: (i, 0)),
        ),
        compiler_params=pltpu.CompilerParams(
            dimension_semantics=("parallel",),
            vmem_limit_bytes=vmem_limit,
        ),
        cost_estimate=pl.CostEstimate(
            flops=flops, transcendentals=0, bytes_accessed=bytes_accessed
        ),
    )(x, u, w_top, w_bot)

    # Split the lane-dense slab back into (z | z_dot | x_hat) in plain JAX.
    z = out[:B, 0:n_z]
    z_dot = out[:B, n_z:2 * n_z]
    x_hat = out[:B, 2 * n_z:2 * n_z + n_x]
    return x_hat, z, z_dot


def model_forward(x, u, w_enc, a, b, w_dec, *, tile_b=None,
                  compute_dtype=jnp.float32):
    """Convenience wrapper: fold weights then run the fused forward."""
    w_top, w_bot, dims = fold_weights(w_enc, a, b, w_dec, dtype=compute_dtype)
    return model_forward_folded(x, u, w_top, w_bot, dims,
                                tile_b=tile_b, compute_dtype=compute_dtype)


def reference_forward(x, u, w_enc, a, b, w_dec):
    z = x @ w_enc
    zdot = z @ a + u @ b
    xhat = z @ w_dec
    return xhat, z, zdot


if __name__ == "__main__":
    # Small deterministic shapes consistent with the encoder/dynamics/decoder
    # contract: batch=8, n_x=32 physical states, n_u=8 controls, n_z=32 latent.
    B, n_x, n_u, n_z = 8, 32, 8, 32

    key = jax.random.PRNGKey(0)
    k_x, k_u, k_we, k_a, k_b, k_wd = jax.random.split(key, 6)

    x = jax.random.normal(k_x, (B, n_x), dtype=jnp.float32)
    u = jax.random.normal(k_u, (B, n_u), dtype=jnp.float32)

    w_enc = 0.1 * jax.random.normal(k_we, (n_x, n_z), dtype=jnp.float32)
    a_mat = 0.1 * jax.random.normal(k_a, (n_z, n_z), dtype=jnp.float32)
    b_mat = 0.1 * jax.random.normal(k_b, (n_u, n_z), dtype=jnp.float32)
    w_dec = 0.1 * jax.random.normal(k_wd, (n_z, n_x), dtype=jnp.float32)

    # Fold the batch-independent weights ONCE; reuse across forward calls.
    w_top, w_bot, dims = fold_weights(w_enc, a_mat, b_mat, w_dec)
    w_top, w_bot = jax.block_until_ready((w_top, w_bot))

    xhat, z, zdot = model_forward_folded(x, u, w_top, w_bot, dims)
    jax.block_until_ready((xhat, z, zdot))

    # Correctness vs plain-JAX reference (tolerance loosened slightly because
    # the folded W_enc@A / W_enc@W_dec change the f32 reduction order).
    xhat_r, z_r, zdot_r = reference_forward(x, u, w_enc, a_mat, b_mat, w_dec)
    assert jnp.allclose(xhat, xhat_r, atol=1e-4, rtol=1e-4)
    assert jnp.allclose(z, z_r, atol=1e-4, rtol=1e-4)
    assert jnp.allclose(zdot, zdot_r, atol=1e-4, rtol=1e-4)

    # Ragged-batch path (B not a multiple of tile_b): padded, reusing the same
    # folded weights (no per-call weight rebuild).
    Br = 5
    xr, ur = x[:Br], u[:Br]
    xhat2, z2, zdot2 = model_forward_folded(xr, ur, w_top, w_bot, dims)
    jax.block_until_ready((xhat2, z2, zdot2))
    xhat2_r, z2_r, zdot2_r = reference_forward(xr, ur, w_enc, a_mat, b_mat, w_dec)
    assert xhat2.shape == (Br, n_x) and z2.shape == (Br, n_z)
    assert jnp.allclose(xhat2, xhat2_r, atol=1e-4, rtol=1e-4)
    assert jnp.allclose(z2, z2_r, atol=1e-4, rtol=1e-4)
    assert jnp.allclose(zdot2, zdot2_r, atol=1e-4, rtol=1e-4)

    print("KERNEL_OK")
</pallas_src>

<mosaic_0001>
module attributes {stable_mosaic.version = 11 : i64} {
  func.func @_fused_forward_kernel(%arg0: i32, %arg1: memref<8x32xf32, #tpu.memory_space<vmem>>, %arg2: memref<8x8xf32, #tpu.memory_space<vmem>>, %arg3: memref<32x128xf32, #tpu.memory_space<vmem>>, %arg4: memref<8x128xf32, #tpu.memory_space<vmem>>, %arg5: memref<8x128xf32, #tpu.memory_space<vmem>>) attributes {dimension_semantics = [#tpu.dimension_semantics<parallel>], iteration_bounds = array<i64: 1>, scalar_prefetch = 0 : i64, scratch_operands = 0 : i64, tpu.core_type = #tpu.core_type<tc>, window_params = [{transform_indices = @transform_0, window_bounds = array<i64: 8, 32>}, {transform_indices = @transform_1, window_bounds = array<i64: 8, 8>}, {pipeline_mode = #tpu.pipeline_mode<synchronous>, transform_indices = @transform_2, window_bounds = array<i64: 32, 128>}, {pipeline_mode = #tpu.pipeline_mode<synchronous>, transform_indices = @transform_3, window_bounds = array<i64: 8, 128>}, {transform_indices = @transform_4, window_bounds = array<i64: 8, 128>}]} {
    %c0 = arith.constant 0 : index
    %c0_0 = arith.constant 0 : index
    %0 = vector.load %arg1[%c0, %c0_0] : memref<8x32xf32, #tpu.memory_space<vmem>>, vector<8x32xf32>
    %c0_1 = arith.constant 0 : index
    %c0_2 = arith.constant 0 : index
    %1 = vector.load %arg3[%c0_1, %c0_2] : memref<32x128xf32, #tpu.memory_space<vmem>>, vector<32x128xf32>
    %cst = arith.constant dense<0.000000e+00> : vector<8x128xf32>
    %2 = tpu.matmul %0, %1, %cst {dimension_numbers = #tpu.dot_dimension_numbers<[1], [0], [0], [1], [0, 0, 1, 1], [], []>} : vector<8x32xf32>, vector<32x128xf32>, vector<8x128xf32> -> vector<8x128xf32>
    %c0_3 = arith.constant 0 : index
    %c0_4 = arith.constant 0 : index
    %3 = vector.load %arg2[%c0_3, %c0_4] : memref<8x8xf32, #tpu.memory_space<vmem>>, vector<8x8xf32>
    %c0_5 = arith.constant 0 : index
    %c0_6 = arith.constant 0 : index
    %4 = vector.load %arg4[%c0_5, %c0_6] : memref<8x128xf32, #tpu.memory_space<vmem>>, vector<8x128xf32>
    %cst_7 = arith.constant dense<0.000000e+00> : vector<8x128xf32>
    %5 = tpu.matmul %3, %4, %cst_7 {dimension_numbers = #tpu.dot_dimension_numbers<[1], [0], [0], [1], [0, 0, 1, 1], [], []>} : vector<8x8xf32>, vector<8x128xf32>, vector<8x128xf32> -> vector<8x128xf32>
    %6 = arith.addf %2, %5 : vector<8x128xf32>
    %c0_8 = arith.constant 0 : index
    %c0_9 = arith.constant 0 : index
    %7 = vector.load %arg5[%c0_8, %c0_9] : memref<8x128xf32, #tpu.memory_space<vmem>>, vector<8x128xf32>
    tpu.vector_store %arg5[%c0_8, %c0_9], %6 {strides = array<i32>} : memref<8x128xf32, #tpu.memory_space<vmem>>, vector<8x128xf32>,
    return
  }
  func.func @transform_0(%arg0: i32) -> (i32, i32) {
    %c0_i32 = arith.constant 0 : i32
    %c0_i32_0 = arith.constant 0 : i32
    return %arg0, %c0_i32 : i32, i32
  }
  func.func @transform_1(%arg0: i32) -> (i32, i32) {
    %c0_i32 = arith.constant 0 : i32
    %c0_i32_0 = arith.constant 0 : i32
    return %arg0, %c0_i32 : i32, i32
  }
  func.func @transform_2(%arg0: i32) -> (i32, i32) {
    %c0_i32 = arith.constant 0 : i32
    %c0_i32_0 = arith.constant 0 : i32
    %c0_i32_1 = arith.constant 0 : i32
    return %c0_i32, %c0_i32_0 : i32, i32
  }
  func.func @transform_3(%arg0: i32) -> (i32, i32) {
    %c0_i32 = arith.constant 0 : i32
    %c0_i32_0 = arith.constant 0 : i32
    %c0_i32_1 = arith.constant 0 : i32
    return %c0_i32, %c0_i32_0 : i32, i32
  }
  func.func @transform_4(%arg0: i32) -> (i32, i32) {
    %c0_i32 = arith.constant 0 : i32
    %c0_i32_0 = arith.constant 0 : i32
    return %arg0, %c0_i32 : i32, i32
  }
}

</mosaic_0001>

<llo_original>
// kernel: tpu_custom_call.1
$region0: #{tpu_custom_call.1}
  #allocation0 [shape = 'u32[]', space=smem, size = 0x4, offset = 0x4, fixed_abs, tag = 'smem constant byte address 0x4 - core index']
  #allocation1 [shape = 'u32[144,128]{1,0:T(1,128)}', space=vmem, size = 0x12000, scoped, tag = 'internal scratch']
  %s0 = inlined_call_operand.hbm [shape: f32[8,32], index: 0, kind: input, shape index: {}]
  %s1 = inlined_call_operand.hbm [shape: f32[8,8], index: 1, kind: input, shape index: {}]
  %s2 = inlined_call_operand.hbm [shape: f32[32,128], index: 2, kind: input, shape index: {}]
  %s3 = inlined_call_operand.hbm [shape: f32[8,128], index: 3, kind: input, shape index: {}]
  %s4 = inlined_call_operand.hbm [shape: f32[8,128], index: 4, kind: output, shape index: {}]
  %s5 = sld [smem:[#allocation0]]
  $region42: #{tpu_custom_call.1} parent=0
    _
  %s7 = ssub.s32 1, %s5
  %s8 = scalar_select 0, %s7, %s5
  $region1: #{tpu_custom_call.1} parent=0
    #allocation2 [shape = 'u8[4096]{0}', space=vmem, size = 0x1000, scoped, tag = 'input window, operand 0, single buffered']
    #allocation3 [shape = 's32[1]{0}', space=sflag, size = 0x4, scoped, tag = 'scoped memory for tpu_custom_call.1']
    #allocation4 [shape = 's32[1]{0}', space=sflag, size = 0x4, scoped, tag = 'scoped memory for tpu_custom_call.1']
    #allocation5 [shape = 'u8[4096]{0}', space=vmem, size = 0x1000, scoped, tag = 'input window, operand 1, single buffered']
    #allocation6 [shape = 's32[1]{0}', space=sflag, size = 0x4, scoped, tag = 'scoped memory for tpu_custom_call.1']
    #allocation7 [shape = 'u8[16384]{0}', space=vmem, size = 0x4000, scoped, tag = 'input window, operand 2, single buffered']
    #allocation8 [shape = 'u8[4096]{0}', space=vmem, size = 0x1000, scoped, tag = 'input window, operand 3, single buffered']
    #allocation9 [shape = 's32[1]{0}', space=sflag, size = 0x4, scoped, tag = 'scoped memory for tpu_custom_call.1']
    #allocation10 [shape = 'u8[4096]{0}', space=vmem, size = 0x1000, scoped, tag = 'output window, operand 0, single buffered']
    %9 = vsyncpa [#allocation3], 0
    %10 = vsyncpa [#allocation6], 0
    %11 = vsyncpa [#allocation9], 0
    %12 = vsyncpa [#allocation4], 0
    // Predicated region
    $region2: #{tpu_custom_call.1} parent=1 // pred_check
      _
    $region3: #{tpu_custom_call.1} parent=1 // pred_check_branch
      %14 = sbr.rel (0) target = $region5
    $region4: #{tpu_custom_call.1} parent=1 // pred_region
      %s16 = ssub.s32 128, 128
      %17 = vsyncadd [#allocation3], %s16
      %s19 = sshll.u32 [#allocation2], 4
      %s20 = int_to_ptr.vmem [resolvable:$true] %s19
      %22 = dma.hbm_to_vmem [thread:$0]  %s0, 128, %s20, [#allocation3]
    $region5: #{tpu_custom_call.1} parent=1 // pred_fallthru
      _
    // Predicated region
    $region6: #{tpu_custom_call.1} parent=1 // pred_check
      _
    $region7: #{tpu_custom_call.1} parent=1 // pred_check_branch
      %24 = sbr.rel (0) target = $region9
    $region8: #{tpu_custom_call.1} parent=1 // pred_region
      %s26 = ssub.s32 128, 128
      %27 = vsyncadd [#allocation6], %s26
      %s29 = sshll.u32 [#allocation5], 4
      %s30 = int_to_ptr.vmem [resolvable:$true] %s29
      %32 = dma.hbm_to_vmem [thread:$0]  %s1, 128, %s30, [#allocation6]
    $region9: #{tpu_custom_call.1} parent=1 // pred_fallthru
      _
    // Predicated region
    $region10: #{tpu_custom_call.1} parent=1 // pred_check
      _
    $region11: #{tpu_custom_call.1} parent=1 // pred_check_branch
      %34 = sbr.rel (0) target = $region13
    $region12: #{tpu_custom_call.1} parent=1 // pred_region
      %s36 = ssub.s32 512, 512
      %37 = vsyncadd [#allocation6], %s36
      %s38 = sshll.u32 [#allocation7], 4
      %s39 = int_to_ptr.vmem [resolvable:$true] %s38
      %44 = dma.hbm_to_vmem [thread:$0]  %s2, 512, %s39, [#allocation6], 128, 128, 8
    $region13: #{tpu_custom_call.1} parent=1 // pred_fallthru
      _
    // Predicated region
    $region14: #{tpu_custom_call.1} parent=1 // pred_check
      _
    $region15: #{tpu_custom_call.1} parent=1 // pred_check_branch
      %46 = sbr.rel (0) target = $region17
    $region16: #{tpu_custom_call.1} parent=1 // pred_region
      %s48 = ssub.s32 128, 128
      %49 = vsyncadd [#allocation9], %s48
      %s51 = sshll.u32 [#allocation8], 4
      %s52 = int_to_ptr.vmem [resolvable:$true] %s51
      %54 = dma.hbm_to_vmem [thread:$0]  %s3, 128, %s52, [#allocation9]
    $region17: #{tpu_custom_call.1} parent=1 // pred_fallthru
      _
    // Predicated region
    $region18: #{tpu_custom_call.1} parent=1 // pred_check
      _
    $region19: #{tpu_custom_call.1} parent=1 // pred_check_branch
      %56 = sbr.rel (0) target = $region21
    $region20: #{tpu_custom_call.1} parent=1 // pred_region
      %57 = dma.done [#allocation3], 128
    $region21: #{tpu_custom_call.1} parent=1 // pred_fallthru
      _
    // Predicated region
    $region22: #{tpu_custom_call.1} parent=1 // pred_check
      _
    $region23: #{tpu_custom_call.1} parent=1 // pred_check_branch
      %59 = sbr.rel (0) target = $region25
    $region24: #{tpu_custom_call.1} parent=1 // pred_region
      %60 = dma.done [#allocation6], 128
    $region25: #{tpu_custom_call.1} parent=1 // pred_fallthru
      _
    // Predicated region
    $region26: #{tpu_custom_call.1} parent=1 // pred_check
      _
    $region27: #{tpu_custom_call.1} parent=1 // pred_check_branch
      %62 = sbr.rel (0) target = $region29
    $region28: #{tpu_custom_call.1} parent=1 // pred_region
      %63 = dma.done [#allocation6], 512
    $region29: #{tpu_custom_call.1} parent=1 // pred_fallthru
      _
    // Predicated region
    $region30: #{tpu_custom_call.1} parent=1 // pred_check
      _
    $region31: #{tpu_custom_call.1} parent=1 // pred_check_branch
      %65 = sbr.rel (0) target = $region33
    $region32: #{tpu_custom_call.1} parent=1 // pred_region
      %66 = dma.done [#allocation9], 128
    $region33: #{tpu_custom_call.1} parent=1 // pred_fallthru
      _
    %v67 = vld [vmem:[#allocation2] sm:$0xff]
    %v68 = vld [vmem:[#allocation7] sm:$0xff]
    %v69 = vld [vmem:[#allocation7 + $0x8] sm:$0xff]
    %v70 = vld [vmem:[#allocation7 + $0x10] sm:$0xff]
    %v71 = vld [vmem:[#allocation7 + $0x18] sm:$0xff]
    %v72 = vld [vmem:[#allocation5] sm:$0xff]
    %v73 = vld [vmem:[#allocation8] sm:$0xff]
    %vm74 = vcmask 64512
    %v76 = vsel %vm74, %v72, 0
    %78 = vmatprep.subr.mxu0 0.0
    %79 = vmatpush1.msra.mxu0 0.0
    %80 = vmatprep.subr.mxu0 0.0
    %81 = vmatpush1.msra.mxu0 0.0
    %82 = vmatprep.subr.mxu0 0.0
    %83 = vmatpush1.msra.mxu0 0.0
    %84 = vmatprep.subr.mxu0 0.0
    %85 = vmatpush1.msra.mxu0 0.0
    %86 = vmatprep.subr.mxu0 0.0
    %87 = vmatpush1.msra.mxu0 0.0
    %88 = vmatprep.subr.mxu0 0.0
    %89 = vmatpush1.msra.mxu0 0.0
    %90 = vmatprep.subr.mxu0 0.0
    %91 = vmatpush1.msra.mxu0 0.0
    %92 = vmatprep.subr.mxu0 0.0
    %93 = vmatpush1.msra.mxu0 0.0
    %94 = vmatprep.subr.mxu0 0.0
    %95 = vmatpush1.msra.mxu0 0.0
    %96 = vmatprep.subr.mxu0 0.0
    %97 = vmatpush1.msra.mxu0 0.0
    %98 = vmatprep.subr.mxu0 0.0
    %99 = vmatpush1.msra.mxu0 0.0
    %100 = vmatprep.subr.mxu0 0.0
    %101 = vmatpush1.msra.mxu0 0.0
    %102 = vmatprep.subr.mxu0 0.0
    %103 = vmatpush1.msra.mxu0 0.0
    %104 = vmatprep.subr.mxu0 0.0
    %105 = vmatpush1.msra.mxu0 0.0
    %106 = vmatprep.subr.mxu0 0.0
    %107 = vmatpush1.msra.mxu0 0.0
    %108 = vmatprep.subr.mxu0 0.0
    %109 = vmatpush1.msra.mxu0 %v73
    %110 = vmatprep.subr.mxu0 0.0
    %111 = vmatpush2.msra.mxu0 0.0
    %112 = vmatprep.subr.mxu0 0.0
    %113 = vmatpush2.msra.mxu0 0.0
    %114 = vmatprep.subr.mxu0 0.0
    %115 = vmatpush2.msra.mxu0 0.0
    %116 = vmatprep.subr.mxu0 0.0
    %117 = vmatpush2.msra.mxu0 0.0
    %118 = vmatprep.subr.mxu0 0.0
    %119 = vmatpush2.msra.mxu0 0.0
    %120 = vmatprep.subr.mxu0 0.0
    %121 = vmatpush2.msra.mxu0 0.0
    %122 = vmatprep.subr.mxu0 0.0
    %123 = vmatpush2.msra.mxu0 0.0
    %124 = vmatprep.subr.mxu0 0.0
    %125 = vmatpush2.msra.mxu0 0.0
    %126 = vmatprep.subr.mxu0 0.0
    %127 = vmatpush2.msra.mxu0 0.0
    %128 = vmatprep.subr.mxu0 0.0
    %129 = vmatpush2.msra.mxu0 0.0
    %130 = vmatprep.subr.mxu0 0.0
    %131 = vmatpush2.msra.mxu0 0.0
    %132 = vmatprep.subr.mxu0 0.0
    %133 = vmatpush2.msra.mxu0 0.0
    %134 = vmatprep.subr.mxu0 0.0
    %135 = vmatpush2.msra.mxu0 0.0
    %136 = vmatprep.subr.mxu0 0.0
    %137 = vmatpush2.msra.mxu0 0.0
    %138 = vmatprep.subr.mxu0 0.0
    %139 = vmatpush2.msra.mxu0 0.0
    %140 = vmatprep.subr.mxu0 0.0
    %141 = vmatpush2.msra.mxu0 0.0
    %142 = vmatprep.mubr.f32.mxu0 0.0
    %143 = vmatmul.mubr.f32.gmra.mxu0 %v76
    %v144 = vpop.f32.mrf.mxu0
    %v145 = vadd.f32 0.0, %v144
    %v146 = vpop.f32.mrf.mxu0
    %147 = vdwg.mxu0
    %vm148 = vcmask 261120
    %v150 = vsel %vm148, %v67, 0
    %152 = vmatprep.subr.mxu0 0.0
    %153 = vmatpush1.msra.mxu0 0.0
    %154 = vmatprep.subr.mxu0 0.0
    %155 = vmatpush1.msra.mxu0 0.0
    %156 = vmatprep.subr.mxu0 0.0
    %157 = vmatpush1.msra.mxu0 0.0
    %158 = vmatprep.subr.mxu0 0.0
    %159 = vmatpush1.msra.mxu0 0.0
    %160 = vmatprep.subr.mxu0 0.0
    %161 = vmatpush1.msra.mxu0 0.0
    %162 = vmatprep.subr.mxu0 0.0
    %163 = vmatpush1.msra.mxu0 0.0
    %164 = vmatprep.subr.mxu0 0.0
    %165 = vmatpush1.msra.mxu0 0.0
    %166 = vmatprep.subr.mxu0 0.0
    %167 = vmatpush1.msra.mxu0 0.0
    %168 = vmatprep.subr.mxu0 0.0
    %169 = vmatpush1.msra.mxu0 0.0
    %170 = vmatprep.subr.mxu0 0.0
    %171 = vmatpush1.msra.mxu0 0.0
    %172 = vmatprep.subr.mxu0 0.0
    %173 = vmatpush1.msra.mxu0 0.0
    %174 = vmatprep.subr.mxu0 0.0
    %175 = vmatpush1.msra.mxu0 0.0
    %176 = vmatprep.subr.mxu0 0.0
    %177 = vmatpush1.msra.mxu0 %v71
    %178 = vmatprep.subr.mxu0 0.0
    %179 = vmatpush1.msra.mxu0 %v70
    %180 = vmatprep.subr.mxu0 0.0
    %181 = vmatpush1.msra.mxu0 %v69
    %182 = vmatprep.subr.mxu0 0.0
    %183 = vmatpush1.msra.mxu0 %v68
    %184 = vmatprep.subr.mxu0 0.0
    %185 = vmatpush2.msra.mxu0 0.0
    %186 = vmatprep.subr.mxu0 0.0
    %187 = vmatpush2.msra.mxu0 0.0
    %188 = vmatprep.subr.mxu0 0.0
    %189 = vmatpush2.msra.mxu0 0.0
    %190 = vmatprep.subr.mxu0 0.0
    %191 = vmatpush2.msra.mxu0 0.0
    %192 = vmatprep.subr.mxu0 0.0
    %193 = vmatpush2.msra.mxu0 0.0
    %194 = vmatprep.subr.mxu0 0.0
    %195 = vmatpush2.msra.mxu0 0.0
    %196 = vmatprep.subr.mxu0 0.0
    %197 = vmatpush2.msra.mxu0 0.0
    %198 = vmatprep.subr.mxu0 0.0
    %199 = vmatpush2.msra.mxu0 0.0
    %200 = vmatprep.subr.mxu0 0.0
    %201 = vmatpush2.msra.mxu0 0.0
    %202 = vmatprep.subr.mxu0 0.0
    %203 = vmatpush2.msra.mxu0 0.0
    %204 = vmatprep.subr.mxu0 0.0
    %205 = vmatpush2.msra.mxu0 0.0
    %206 = vmatprep.subr.mxu0 0.0
    %207 = vmatpush2.msra.mxu0 0.0
    %208 = vmatprep.subr.mxu0 0.0
    %209 = vmatpush2.msra.mxu0 0.0
    %210 = vmatprep.subr.mxu0 0.0
    %211 = vmatpush2.msra.mxu0 0.0
    %212 = vmatprep.subr.mxu0 0.0
    %213 = vmatpush2.msra.mxu0 0.0
    %214 = vmatprep.subr.mxu0 0.0
    %215 = vmatpush2.msra.mxu0 0.0
    %216 = vmatprep.mubr.f32.mxu0 0.0
    %217 = vmatmul.mubr.f32.gmra.mxu0 %v150
    %v218 = vpop.f32.mrf.mxu0
    %v219 = vadd.f32 %v145, %v218
    %v220 = vpop.f32.mrf.mxu0
    %221 = vdwg.mxu0
    %222 = vst [vmem:[#allocation10] sm:$0xff] %v219
    // Predicated region
    $region34: #{tpu_custom_call.1} parent=1 // pred_check
      _
    $region35: #{tpu_custom_call.1} parent=1 // pred_check_branch
      %224 = sbr.rel (0) target = $region37
    $region36: #{tpu_custom_call.1} parent=1 // pred_region
      %s226 = ssub.s32 128, 128
      %227 = vsyncadd [#allocation4], %s226
      %s229 = sshll.u32 [#allocation10], 4
      %s230 = int_to_ptr.vmem [resolvable:$true] %s229
      %232 = dma.vmem_to_hbm [thread:$0]  %s230, 128, %s4, [#allocation4]
    $region37: #{tpu_custom_call.1} parent=1 // pred_fallthru
      _
    // Predicated region
    $region38: #{tpu_custom_call.1} parent=1 // pred_check
      _
    $region39: #{tpu_custom_call.1} parent=1 // pred_check_branch
      %234 = sbr.rel (0) target = $region41
    $region40: #{tpu_custom_call.1} parent=1 // pred_region
      %235 = dma.done [#allocation4], 128
    $region41: #{tpu_custom_call.1} parent=1 // pred_fallthru
      _
    %236 = vsyncpa [#allocation3], 1
    %237 = vsyncpa [#allocation6], 1
    %238 = vsyncpa [#allocation9], 1
    %239 = vsyncpa [#allocation4], 1

</llo_original>
